<compile_context>
chip_gen: v6e
topology: v6e:2x2x1
jax: 0.10.0
libtpu: 0.0.40
codegen_flags: <defaults>
</compile_context>

<pallas_src>
import functools

import jax
import jax.numpy as jnp
from jax.experimental import pallas as pl
from jax.experimental.pallas import tpu as pltpu

LANE = 128


def _default_block_rows() -> int:
    """Batch-tile rows: 128 fills v5e's 4x128 MXU, 256 fills v6e/v7x's 2x256 MXU."""
    try:
        kind = jax.devices()[0].device_kind.lower()
    except Exception:
        return 128
    return 128 if "v5" in kind else 256


def nli_head_kernel(cls_ref, wp_ref, bp_ref, wc_ref, bc_ref,
                    logits_ref, probs_ref, *, num_labels):
    # cls_ref:    [BM, H]     CLS-token hidden states (input dtype)
    # wp_ref:     [H, H]      pooler dense weight, (in, out), bf16, VMEM-resident
    # bp_ref:     [1, H]      pooler dense bias, f32
    # wc_ref:     [H, Lpad]   classifier weight, (in, out), bf16, lane-padded
    # bc_ref:     [1, Lpad]   classifier bias, f32, zero-padded
    cls = cls_ref[...].astype(jnp.bfloat16)

    # BERT pooler: tanh(CLS @ Wp + bp) -> pooler_output  (bf16 MXU, f32 accumulate)
    pooled = jnp.tanh(
        jnp.dot(cls, wp_ref[...], preferred_element_type=jnp.float32) + bp_ref[...]
    )

    # TODO(synk): nn.Dropout(p=0.1) is identity at inference; training-mode dropout
    # (pltpu.prng_random_bits mask + 1/(1-p) scale) is omitted.

    # Classifier: logits = pooled @ Wc + bc  (bf16 MXU, f32 accumulate)
    logits = (
        jnp.dot(pooled.astype(jnp.bfloat16), wc_ref[...],
                preferred_element_type=jnp.float32)
        + bc_ref[...]
    )

    # Mask lane-padding columns so the softmax ignores them.
    lane_idx = jax.lax.broadcasted_iota(jnp.int32, logits.shape, 1)
    logits = jnp.where(lane_idx < num_labels, logits, jnp.float32(-1e30))

    logits_ref[...] = logits.astype(logits_ref.dtype)

    # Numerically-stable softmax over labels; divide goes to the EUP (approx recip).
    m = jnp.max(logits, axis=1, keepdims=True)
    e = jnp.exp(logits - m)
    inv = pl.reciprocal(jnp.sum(e, axis=1, keepdims=True), approx=True)
    probs_ref[...] = (e * inv).astype(probs_ref.dtype)


def prepare_nli_head_params(wp, bp, wc, bc):
    """One-time weight prep (call OUTSIDE the per-step forward): transpose torch
    [out, in] Linears to (in, out), cast weights to bf16 for the MXU, and pad the
    classifier to a lane-dense width (multiple of 128)."""
    wp = jnp.asarray(wp)
    wc = jnp.asarray(wc)
    H = wp.shape[0]
    L = wc.shape[0]
    l_pad = pl.cdiv(L, LANE) * LANE
    wp_t = wp.T.astype(jnp.bfloat16)                                  # [H, H]
    bp2 = jnp.asarray(bp, jnp.float32).reshape(1, H)                  # [1, H]
    wc_t = jnp.zeros((H, l_pad), jnp.bfloat16).at[:, :L].set(wc.T.astype(jnp.bfloat16))
    bc2 = jnp.zeros((1, l_pad), jnp.float32).at[0, :L].set(jnp.asarray(bc, jnp.float32))
    return wp_t, bp2, wc_t, bc2


@functools.partial(jax.jit, static_argnames=("num_labels", "block_rows"))
def nli_cls_forward(last_hidden_state, wp_t, bp2, wc_t, bc2, *,
                    num_labels, block_rows=128):
    """last_hidden_state: [B, S, H]; remaining args from prepare_nli_head_params.
    Returns (logits [B, num_labels], probs [B, num_labels])."""
    B, S, H = last_hidden_state.shape
    l_pad = wc_t.shape[1]
    bm = min(block_rows, B)

    if H % LANE == 0:
        # Fuse the CLS slice into the kernel DMA: view as [B, S*H] and window the
        # first H columns (free reshape; only CLS rows are read from HBM).
        cls_src = last_hidden_state.reshape(B, S * H)
    else:
        # Odd/tiny hidden sizes: the lane constraint forbids an H-wide window of
        # the flattened row, so slice the CLS token in XLA (cheap [B, H] copy).
        cls_src = last_hidden_state[:, 0, :]
    cls_spec = pl.BlockSpec((bm, H), lambda i: (i, 0))

    grid = (pl.cdiv(B, bm),)
    const = lambda i: (0, 0)  # weights/biases stay resident across batch tiles

    # VMEM budget: double-buffered cls tiles + resident weights + output tiles.
    itemsize = jnp.dtype(last_hidden_state.dtype).itemsize
    vmem_bytes = 2 * (bm * H * itemsize            # cls tiles
                      + H * H * 2 + H * 4          # Wp (bf16) + bp (f32)
                      + H * l_pad * 2 + l_pad * 4  # Wc (bf16) + bc (f32)
                      + 2 * bm * l_pad * 4)        # logits + probs tiles
    vmem_limit = int(min(max(vmem_bytes + (8 << 20), 32 << 20), 64 << 20))

    logits_pad, probs_pad = pl.pallas_call(
        functools.partial(nli_head_kernel, num_labels=num_labels),
        out_shape=(
            jax.ShapeDtypeStruct((B, l_pad), jnp.float32),
            jax.ShapeDtypeStruct((B, l_pad), jnp.float32),
        ),
        grid_spec=pltpu.PrefetchScalarGridSpec(
            num_scalar_prefetch=0,
            grid=grid,
            in_specs=[
                cls_spec,
                pl.BlockSpec((H, H), const),
                pl.BlockSpec((1, H), const),
                pl.BlockSpec((H, l_pad), const),
                pl.BlockSpec((1, l_pad), const),
            ],
            out_specs=(
                pl.BlockSpec((bm, l_pad), lambda i: (i, 0)),
                pl.BlockSpec((bm, l_pad), lambda i: (i, 0)),
            ),
        ),
        compiler_params=pltpu.CompilerParams(
            dimension_semantics=("parallel",),   # megacore-shard batch tiles (v7x)
            vmem_limit_bytes=vmem_limit,
        ),
    )(cls_src, wp_t, bp2, wc_t, bc2)

    return logits_pad[:, :num_labels], probs_pad[:, :num_labels]


if __name__ == "__main__":
    # Small shapes consistent with the module's forward.  hidden=128 keeps the
    # lane dimension TPU-friendly (real BERT hiddens 768/1024 are also multiples
    # of 128); batch=2, seq=8, num_labels=3.
    B, S, H, L = 2, 8, 128, 3

    key = jax.random.PRNGKey(0)
    k_hid, k_wp, k_bp, k_wc, k_bc = jax.random.split(key, 5)

    # Stand-in for bert(...).last_hidden_state and the head parameters
    # (torch Linear layout: weight [out, in], bias [out]).
    last_hidden_state = jax.random.normal(k_hid, (B, S, H), dtype=jnp.float32)
    wp = jax.random.normal(k_wp, (H, H), dtype=jnp.float32) * 0.05   # pooler.dense.weight
    bp = jax.random.normal(k_bp, (H,), dtype=jnp.float32) * 0.05     # pooler.dense.bias
    wc = jax.random.normal(k_wc, (L, H), dtype=jnp.float32) * 0.05   # classifier.weight
    bc = jax.random.normal(k_bc, (L,), dtype=jnp.float32) * 0.05     # classifier.bias

    # One-time weight prep (hoisted out of the hot path).
    wp_t, bp2, wc_t, bc2 = prepare_nli_head_params(wp, bp, wc, bc)

    block_rows = _default_block_rows()
    logits, probs = nli_cls_forward(last_hidden_state, wp_t, bp2, wc_t, bc2,
                                    num_labels=L, block_rows=block_rows)
    jax.block_until_ready((logits, probs))

    # --- references -------------------------------------------------------
    cls = last_hidden_state[:, 0, :]

    # (a) bf16-matched reference (same MXU precision choices as the kernel).
    pooled_bf = jnp.tanh(
        jnp.dot(cls.astype(jnp.bfloat16), wp.T.astype(jnp.bfloat16),
                preferred_element_type=jnp.float32) + bp)
    logits_bf = jnp.dot(pooled_bf.astype(jnp.bfloat16), wc.T.astype(jnp.bfloat16),
                        preferred_element_type=jnp.float32) + bc
    probs_bf = jax.nn.softmax(logits_bf, axis=1)

    # (b) full-f32 reference (exact torch-module semantics).
    pooled_f32 = jnp.tanh(cls @ wp.T + bp)
    logits_f32 = pooled_f32 @ wc.T + bc
    probs_f32 = jax.nn.softmax(logits_f32, axis=1)

    assert logits.shape == (B, L) and probs.shape == (B, L)
    assert jnp.allclose(logits, logits_bf, atol=5e-3, rtol=5e-3)
    assert jnp.allclose(probs, probs_bf, atol=5e-3, rtol=5e-3)      # approx reciprocal
    assert jnp.allclose(logits, logits_f32, atol=5e-2, rtol=5e-2)   # bf16 weight path
    assert jnp.allclose(probs, probs_f32, atol=2e-2, rtol=2e-2)
    assert jnp.allclose(jnp.sum(probs, axis=1), 1.0, atol=5e-3)

    print("KERNEL_OK")
</pallas_src>

<mosaic_0001>
module attributes {stable_mosaic.version = 11 : i64} {
  func.func @nli_head_kernel(%arg0: i32, %arg1: memref<2x128xf32, #tpu.memory_space<vmem>>, %arg2: memref<128x128xbf16, #tpu.memory_space<vmem>>, %arg3: memref<1x128xf32, #tpu.memory_space<vmem>>, %arg4: memref<128x128xbf16, #tpu.memory_space<vmem>>, %arg5: memref<1x128xf32, #tpu.memory_space<vmem>>, %arg6: memref<2x128xf32, #tpu.memory_space<vmem>>, %arg7: memref<2x128xf32, #tpu.memory_space<vmem>>) attributes {dimension_semantics = [#tpu.dimension_semantics<parallel>], iteration_bounds = array<i64: 1>, scalar_prefetch = 0 : i64, scratch_operands = 0 : i64, tpu.core_type = #tpu.core_type<tc>, window_params = [{transform_indices = @transform_0, window_bounds = array<i64: 2, 128>}, {pipeline_mode = #tpu.pipeline_mode<synchronous>, transform_indices = @transform_1, window_bounds = array<i64: 128, 128>}, {pipeline_mode = #tpu.pipeline_mode<synchronous>, transform_indices = @transform_2, window_bounds = array<i64: 1, 128>}, {pipeline_mode = #tpu.pipeline_mode<synchronous>, transform_indices = @transform_3, window_bounds = array<i64: 128, 128>}, {pipeline_mode = #tpu.pipeline_mode<synchronous>, transform_indices = @transform_4, window_bounds = array<i64: 1, 128>}, {transform_indices = @transform_5, window_bounds = array<i64: 2, 128>}, {transform_indices = @transform_6, window_bounds = array<i64: 2, 128>}]} {
    %c0 = arith.constant 0 : index
    %c0_0 = arith.constant 0 : index
    %0 = vector.load %arg1[%c0, %c0_0] : memref<2x128xf32, #tpu.memory_space<vmem>>, vector<2x128xf32>
    %1 = arith.truncf %0 : vector<2x128xf32> to vector<2x128xbf16>
    %c0_1 = arith.constant 0 : index
    %c0_2 = arith.constant 0 : index
    %2 = vector.load %arg2[%c0_1, %c0_2] : memref<128x128xbf16, #tpu.memory_space<vmem>>, vector<128x128xbf16>
    %cst = arith.constant dense<0.000000e+00> : vector<2x128xf32>
    %3 = tpu.matmul %1, %2, %cst {dimension_numbers = #tpu.dot_dimension_numbers<[1], [0], [0], [1], [0, 0, 1, 1], [], []>} : vector<2x128xbf16>, vector<128x128xbf16>, vector<2x128xf32> -> vector<2x128xf32>
    %c0_3 = arith.constant 0 : index
    %c0_4 = arith.constant 0 : index
    %4 = vector.load %arg3[%c0_3, %c0_4] : memref<1x128xf32, #tpu.memory_space<vmem>>, vector<1x128xf32>
    %5 = vector.broadcast %4 : vector<1x128xf32> to vector<2x128xf32>
    %6 = arith.addf %3, %5 : vector<2x128xf32>
    %7 = math.tanh %6 : vector<2x128xf32>
    %8 = arith.truncf %7 : vector<2x128xf32> to vector<2x128xbf16>
    %c0_5 = arith.constant 0 : index
    %c0_6 = arith.constant 0 : index
    %9 = vector.load %arg4[%c0_5, %c0_6] : memref<128x128xbf16, #tpu.memory_space<vmem>>, vector<128x128xbf16>
    %cst_7 = arith.constant dense<0.000000e+00> : vector<2x128xf32>
    %10 = tpu.matmul %8, %9, %cst_7 {dimension_numbers = #tpu.dot_dimension_numbers<[1], [0], [0], [1], [0, 0, 1, 1], [], []>} : vector<2x128xbf16>, vector<128x128xbf16>, vector<2x128xf32> -> vector<2x128xf32>
    %c0_8 = arith.constant 0 : index
    %c0_9 = arith.constant 0 : index
    %11 = vector.load %arg5[%c0_8, %c0_9] : memref<1x128xf32, #tpu.memory_space<vmem>>, vector<1x128xf32>
    %12 = vector.broadcast %11 : vector<1x128xf32> to vector<2x128xf32>
    %13 = arith.addf %10, %12 : vector<2x128xf32>
    %14 = tpu.iota {dimensions = array<i32: 1>} : vector<2x128xi32>
    %c3_i32 = arith.constant 3 : i32
    %15 = vector.broadcast %c3_i32 : i32 to vector<2x128xi32>
    %16 = arith.cmpi slt, %14, %15 : vector<2x128xi32>
    %cst_10 = arith.constant -1.000000e+30 : f32
    %17 = vector.broadcast %cst_10 : f32 to vector<2x128xf32>
    %18 = arith.select %16, %13, %17 : vector<2x128xi1>, vector<2x128xf32>
    %c0_11 = arith.constant 0 : index
    %c0_12 = arith.constant 0 : index
    %19 = vector.load %arg6[%c0_11, %c0_12] : memref<2x128xf32, #tpu.memory_space<vmem>>, vector<2x128xf32>
    tpu.vector_store %arg6[%c0_11, %c0_12], %18 {strides = array<i32>} : memref<2x128xf32, #tpu.memory_space<vmem>>, vector<2x128xf32>,
    %cst_13 = arith.constant dense<0xFF800000> : vector<2xf32>
    %20 = vector.multi_reduction <maximumf>, %18, %cst_13 [1] : vector<2x128xf32> to vector<2xf32>
    %21 = vector.shape_cast %20 : vector<2xf32> to vector<2x1xf32>
    %22 = vector.broadcast %21 : vector<2x1xf32> to vector<2x128xf32>
    %23 = arith.subf %18, %22 : vector<2x128xf32>
    %24 = math.exp %23 : vector<2x128xf32>
    %cst_14 = arith.constant dense<0.000000e+00> : vector<2xf32>
    %25 = vector.multi_reduction <add>, %24, %cst_14 [1] : vector<2x128xf32> to vector<2xf32>
    %26 = vector.shape_cast %25 : vector<2xf32> to vector<2x1xf32>
    %27 = tpu.reciprocal %26 {approx = true} : vector<2x1xf32> -> vector<2x1xf32>
    %28 = vector.broadcast %27 : vector<2x1xf32> to vector<2x128xf32>
    %29 = arith.mulf %24, %28 : vector<2x128xf32>
    %c0_15 = arith.constant 0 : index
    %c0_16 = arith.constant 0 : index
    %30 = vector.load %arg7[%c0_15, %c0_16] : memref<2x128xf32, #tpu.memory_space<vmem>>, vector<2x128xf32>
    tpu.vector_store %arg7[%c0_15, %c0_16], %29 {strides = array<i32>} : memref<2x128xf32, #tpu.memory_space<vmem>>, vector<2x128xf32>,
    return
  }
  func.func @transform_0(%arg0: i32) -> (i32, i32) {
    %c0_i32 = arith.constant 0 : i32
    %c0_i32_0 = arith.constant 0 : i32
    return %arg0, %c0_i32 : i32, i32
  }
  func.func @transform_1(%arg0: i32) -> (i32, i32) {
    %c0_i32 = arith.constant 0 : i32
    %c0_i32_0 = arith.constant 0 : i32
    %c0_i32_1 = arith.constant 0 : i32
    return %c0_i32, %c0_i32_0 : i32, i32
  }
  func.func @transform_2(%arg0: i32) -> (i32, i32) {
    %c0_i32 = arith.constant 0 : i32
    %c0_i32_0 = arith.constant 0 : i32
    %c0_i32_1 = arith.constant 0 : i32
    return %c0_i32, %c0_i32_0 : i32, i32
  }
  func.func @transform_3(%arg0: i32) -> (i32, i32) {
    %c0_i32 = arith.constant 0 : i32
    %c0_i32_0 = arith.constant 0 : i32
    %c0_i32_1 = arith.constant 0 : i32
    return %c0_i32, %c0_i32_0 : i32, i32
  }
  func.func @transform_4(%arg0: i32) -> (i32, i32) {
    %c0_i32 = arith.constant 0 : i32
    %c0_i32_0 = arith.constant 0 : i32
    %c0_i32_1 = arith.constant 0 : i32
    return %c0_i32, %c0_i32_0 : i32, i32
  }
  func.func @transform_5(%arg0: i32) -> (i32, i32) {
    %c0_i32 = arith.constant 0 : i32
    %c0_i32_0 = arith.constant 0 : i32
    return %arg0, %c0_i32 : i32, i32
  }
  func.func @transform_6(%arg0: i32) -> (i32, i32) {
    %c0_i32 = arith.constant 0 : i32
    %c0_i32_0 = arith.constant 0 : i32
    return %arg0, %c0_i32 : i32, i32
  }
}

</mosaic_0001>

<llo_original>
// kernel: nli_cls_forward.1
$region0: #{nli_cls_forward.1}
  #allocation0 [shape = 'u32[]', space=smem, size = 0x4, offset = 0x4, fixed_abs, tag = 'smem constant byte address 0x4 - core index']
  #allocation1 [shape = 'u32[144,128]{1,0:T(1,128)}', space=vmem, size = 0x12000, scoped, tag = 'internal scratch']
  %s0 = inlined_call_operand.vmem [shape: f32[2,1024], index: 0, kind: input, shape index: {}]
  %s1 = inlined_call_operand.hbm [shape: bf16[128,128], index: 1, kind: input, shape index: {}]
  %s2 = inlined_call_operand.vmem [shape: f32[1,128], index: 2, kind: input, shape index: {}]
  %s3 = inlined_call_operand.hbm [shape: bf16[128,128], index: 3, kind: input, shape index: {}]
  %s4 = inlined_call_operand.vmem [shape: f32[1,128], index: 4, kind: input, shape index: {}]
  %s5 = inlined_call_operand.hbm [shape: f32[2,128], index: 5, kind: output, shape index: {0}]
  %s6 = inlined_call_operand.hbm [shape: f32[2,128], index: 6, kind: output, shape index: {1}]
  %7 = xla_tuple %s5, %s6
  %s8 = sld [smem:[#allocation0]]
  $region46: #{nli_cls_forward.1} parent=0
    _
  %s10 = ssub.s32 1, %s8
  %s11 = scalar_select 0, %s10, %s8
  $region1: #{nli_cls_forward.1} parent=0
    #allocation2 [shape = 'u8[32768]{0}', space=vmem, size = 0x8000, scoped, tag = 'input window, operand 1, single buffered']
    #allocation3 [shape = 's32[1]{0}', space=sflag, size = 0x4, scoped, tag = 'scoped memory for nli_cls_forward.1']
    #allocation4 [shape = 's32[1]{0}', space=sflag, size = 0x4, scoped, tag = 'scoped memory for nli_cls_forward.1']
    #allocation5 [shape = 'u8[32768]{0}', space=vmem, size = 0x8000, scoped, tag = 'input window, operand 3, single buffered']
    #allocation6 [shape = 's32[1]{0}', space=sflag, size = 0x4, scoped, tag = 'scoped memory for nli_cls_forward.1']
    #allocation7 [shape = 'u8[1024]{0}', space=vmem, size = 0x400, scoped, tag = 'output window, operand 0, single buffered']
    #allocation8 [shape = 'u8[1024]{0}', space=vmem, size = 0x400, scoped, tag = 'output window, operand 1, single buffered']
    #allocation9 [shape = 's32[1]{0}', space=sflag, size = 0x4, scoped, tag = 'scoped memory for nli_cls_forward.1']
    %12 = vsyncpa [#allocation3], 0
    %13 = vsyncpa [#allocation6], 0
    %14 = vsyncpa [#allocation4], 0
    %15 = vsyncpa [#allocation9], 0
    // Predicated region
    $region2: #{nli_cls_forward.1} parent=1 // pred_check
      _
    $region3: #{nli_cls_forward.1} parent=1 // pred_check_branch
      %17 = sbr.rel (0) target = $region5
    $region4: #{nli_cls_forward.1} parent=1 // pred_region
      _
    $region5: #{nli_cls_forward.1} parent=1 // pred_fallthru
      _
    // Predicated region
    $region6: #{nli_cls_forward.1} parent=1 // pred_check
      _
    $region7: #{nli_cls_forward.1} parent=1 // pred_check_branch
      %19 = sbr.rel (0) target = $region9
    $region8: #{nli_cls_forward.1} parent=1 // pred_region
      %s21 = ssub.s32 1024, 1024
      %22 = vsyncadd [#allocation3], %s21
      %s23 = sshll.u32 [#allocation2], 4
      %s24 = int_to_ptr.vmem [resolvable:$true] %s23
      %29 = dma.hbm_to_vmem [thread:$0]  %s1, 1024, %s24, [#allocation3], 64, 64, 4
    $region9: #{nli_cls_forward.1} parent=1 // pred_fallthru
      _
    // Predicated region
    $region10: #{nli_cls_forward.1} parent=1 // pred_check
      _
    $region11: #{nli_cls_forward.1} parent=1 // pred_check_branch
      %31 = sbr.rel (0) target = $region13
    $region12: #{nli_cls_forward.1} parent=1 // pred_region
      _
    $region13: #{nli_cls_forward.1} parent=1 // pred_fallthru
      _
    // Predicated region
    $region14: #{nli_cls_forward.1} parent=1 // pred_check
      _
    $region15: #{nli_cls_forward.1} parent=1 // pred_check_branch
      %33 = sbr.rel (0) target = $region17
    $region16: #{nli_cls_forward.1} parent=1 // pred_region
      %s35 = ssub.s32 1024, 1024
      %36 = vsyncadd [#allocation6], %s35
      %s37 = sshll.u32 [#allocation5], 4
      %s38 = int_to_ptr.vmem [resolvable:$true] %s37
      %43 = dma.hbm_to_vmem [thread:$0]  %s3, 1024, %s38, [#allocation6], 64, 64, 4
    $region17: #{nli_cls_forward.1} parent=1 // pred_fallthru
      _
    // Predicated region
    $region18: #{nli_cls_forward.1} parent=1 // pred_check
      _
    $region19: #{nli_cls_forward.1} parent=1 // pred_check_branch
      %45 = sbr.rel (0) target = $region21
    $region20: #{nli_cls_forward.1} parent=1 // pred_region
      _
    $region21: #{nli_cls_forward.1} parent=1 // pred_fallthru
      _
    // Predicated region
    $region22: #{nli_cls_forward.1} parent=1 // pred_check
      _
    $region23: #{nli_cls_forward.1} parent=1 // pred_check_branch
      %47 = sbr.rel (0) target = $region25
    $region24: #{nli_cls_forward.1} parent=1 // pred_region
      %48 = dma.done [#allocation3], 1024
    $region25: #{nli_cls_forward.1} parent=1 // pred_fallthru
      _
    // Predicated region
    $region26: #{nli_cls_forward.1} parent=1 // pred_check
      _
    $region27: #{nli_cls_forward.1} parent=1 // pred_check_branch
      %50 = sbr.rel (0) target = $region29
    $region28: #{nli_cls_forward.1} parent=1 // pred_region
      %51 = dma.done [#allocation6], 1024
    $region29: #{nli_cls_forward.1} parent=1 // pred_fallthru
      _
    %v53 = vld [vmem:[%s0] sm:$0x3]
    %v54 = vpack.c.bf16 %v53, %v53
    %v55 = vld [vmem:[#allocation2] sm:$0xf]
    %v56 = vld [vmem:[#allocation2 + $0x4] sm:$0xf]
    %v57 = vld [vmem:[#allocation2 + $0x8] sm:$0xf]
    %v58 = vld [vmem:[#allocation2 + $0xc] sm:$0xf]
    %v59 = vld [vmem:[#allocation2 + $0x10] sm:$0xf]
    %v60 = vld [vmem:[#allocation2 + $0x14] sm:$0xf]
    %v61 = vld [vmem:[#allocation2 + $0x18] sm:$0xf]
    %v62 = vld [vmem:[#allocation2 + $0x1c] sm:$0xf]
    %v63 = vld [vmem:[#allocation2 + $0x20] sm:$0xf]
    %v64 = vld [vmem:[#allocation2 + $0x24] sm:$0xf]
    %v65 = vld [vmem:[#allocation2 + $0x28] sm:$0xf]
    %v66 = vld [vmem:[#allocation2 + $0x2c] sm:$0xf]
    %v67 = vld [vmem:[#allocation2 + $0x30] sm:$0xf]
    %v68 = vld [vmem:[#allocation2 + $0x34] sm:$0xf]
    %v69 = vld [vmem:[#allocation2 + $0x38] sm:$0xf]
    %v70 = vld [vmem:[#allocation2 + $0x3c] sm:$0xf]
    %v71 = vld [vmem:[%s2] sm:$0x1]
    %v73 = vlaneseq
    %v74 = vshrl.u32 %v73, 7
    %v75 = vsub.s32 0, %v74
    %v76 = vrot.slane %v71, %v75
    %v94 = vunpack.c.l.b16 %v55
    %v95 = vunpack.c.l.b16 %v56
    %v96 = vunpack.c.l.b16 %v57
    %v97 = vunpack.c.l.b16 %v58
    %v98 = vunpack.c.l.b16 %v59
    %v99 = vunpack.c.l.b16 %v60
    %v100 = vunpack.c.l.b16 %v61
    %v101 = vunpack.c.l.b16 %v62
    %v102 = vunpack.c.l.b16 %v63
    %v103 = vunpack.c.l.b16 %v64
    %v104 = vunpack.c.l.b16 %v65
    %v105 = vunpack.c.l.b16 %v66
    %v106 = vunpack.c.l.b16 %v67
    %v107 = vunpack.c.l.b16 %v68
    %v108 = vunpack.c.l.b16 %v69
    %v109 = vunpack.c.l.b16 %v70
    %v110 = vpack.c.b16 %v95, %v94
    %v111 = vpack.c.b16 %v97, %v96
    %v112 = vpack.c.b16 %v99, %v98
    %v113 = vpack.c.b16 %v101, %v100
    %v114 = vpack.c.b16 %v103, %v102
    %v115 = vpack.c.b16 %v105, %v104
    %v116 = vpack.c.b16 %v107, %v106
    %v117 = vpack.c.b16 %v109, %v108
    %126 = vmatprep.subr.bf16.mxu0 0
    %127 = vmatpush1.bf16.msra.mxu0 %v117
    %128 = vmatprep.subr.bf16.mxu0 0
    %129 = vmatpush1.bf16.msra.mxu0 %v116
    %130 = vmatprep.subr.bf16.mxu0 0
    %131 = vmatpush1.bf16.msra.mxu0 %v115
    %132 = vmatprep.subr.bf16.mxu0 0
    %133 = vmatpush1.bf16.msra.mxu0 %v114
    %134 = vmatprep.subr.bf16.mxu0 0
    %135 = vmatpush1.bf16.msra.mxu0 %v113
    %136 = vmatprep.subr.bf16.mxu0 0
    %137 = vmatpush1.bf16.msra.mxu0 %v112
    %138 = vmatprep.subr.bf16.mxu0 0
    %139 = vmatpush1.bf16.msra.mxu0 %v111
    %140 = vmatprep.subr.bf16.mxu0 0
    %141 = vmatpush1.bf16.msra.mxu0 %v110
    %142 = vmatprep.subr.bf16.mxu0 0
    %143 = vmatpush2.bf16.msra.mxu0 0
    %144 = vmatprep.subr.bf16.mxu0 0
    %145 = vmatpush2.bf16.msra.mxu0 0
    %146 = vmatprep.subr.bf16.mxu0 0
    %147 = vmatpush2.bf16.msra.mxu0 0
    %148 = vmatprep.subr.bf16.mxu0 0
    %149 = vmatpush2.bf16.msra.mxu0 0
    %150 = vmatprep.subr.bf16.mxu0 0
    %151 = vmatpush2.bf16.msra.mxu0 0
    %152 = vmatprep.subr.bf16.mxu0 0
    %153 = vmatpush2.bf16.msra.mxu0 0
    %154 = vmatprep.subr.bf16.mxu0 0
    %155 = vmatpush2.bf16.msra.mxu0 0
    %156 = vmatprep.subr.bf16.mxu0 0
    %157 = vmatpush2.bf16.msra.mxu0 0
    %158 = vmatprep.mubr.bf16.mxu0 0
    %159 = vmatmul.mubr.bf16.gmra.mxu0 %v54
    %v160 = vpop.f32.mrf.mxu0
    %v161 = vadd.f32 %v76, %v160
    %v162 = vpop.f32.mrf.mxu0
    %v163 = vpop.f32.mrf.mxu0
    %v164 = vpop.f32.mrf.mxu0
    %165 = vdwg.mxu0
    %v166 = vtanh.pop %v161
    %v167 = vpack.c.bf16 %v166, %v166
    %v168 = vld [vmem:[#allocation5] sm:$0xf]
    %v169 = vld [vmem:[#allocation5 + $0x4] sm:$0xf]
    %v170 = vld [vmem:[#allocation5 + $0x8] sm:$0xf]
    %v171 = vld [vmem:[#allocation5 + $0xc] sm:$0xf]
    %v172 = vld [vmem:[#allocation5 + $0x10] sm:$0xf]
    %v173 = vld [vmem:[#allocation5 + $0x14] sm:$0xf]
    %v174 = vld [vmem:[#allocation5 + $0x18] sm:$0xf]
    %v175 = vld [vmem:[#allocation5 + $0x1c] sm:$0xf]
    %v176 = vld [vmem:[#allocation5 + $0x20] sm:$0xf]
    %v177 = vld [vmem:[#allocation5 + $0x24] sm:$0xf]
    %v178 = vld [vmem:[#allocation5 + $0x28] sm:$0xf]
    %v179 = vld [vmem:[#allocation5 + $0x2c] sm:$0xf]
    %v180 = vld [vmem:[#allocation5 + $0x30] sm:$0xf]
    %v181 = vld [vmem:[#allocation5 + $0x34] sm:$0xf]
    %v182 = vld [vmem:[#allocation5 + $0x38] sm:$0xf]
    %v183 = vld [vmem:[#allocation5 + $0x3c] sm:$0xf]
    %v184 = vld [vmem:[%s4] sm:$0x1]
    %v186 = vlaneseq
    %v187 = vshrl.u32 %v186, 7
    %v188 = vsub.s32 0, %v187
    %v189 = vrot.slane %v184, %v188
    %v207 = vunpack.c.l.b16 %v168
    %v208 = vunpack.c.l.b16 %v169
    %v209 = vunpack.c.l.b16 %v170
    %v210 = vunpack.c.l.b16 %v171
    %v211 = vunpack.c.l.b16 %v172
    %v212 = vunpack.c.l.b16 %v173
    %v213 = vunpack.c.l.b16 %v174
    %v214 = vunpack.c.l.b16 %v175
    %v215 = vunpack.c.l.b16 %v176
    %v216 = vunpack.c.l.b16 %v177
    %v217 = vunpack.c.l.b16 %v178
    %v218 = vunpack.c.l.b16 %v179
    %v219 = vunpack.c.l.b16 %v180
    %v220 = vunpack.c.l.b16 %v181
    %v221 = vunpack.c.l.b16 %v182
    %v222 = vunpack.c.l.b16 %v183
    %v223 = vpack.c.b16 %v208, %v207
    %v224 = vpack.c.b16 %v210, %v209
    %v225 = vpack.c.b16 %v212, %v211
    %v226 = vpack.c.b16 %v214, %v213
    %v227 = vpack.c.b16 %v216, %v215
    %v228 = vpack.c.b16 %v218, %v217
    %v229 = vpack.c.b16 %v220, %v219
    %v230 = vpack.c.b16 %v222, %v221
    %239 = vmatprep.subr.bf16.mxu0 0
    %240 = vmatpush1.bf16.msra.mxu0 %v230
    %241 = vmatprep.subr.bf16.mxu0 0
    %242 = vmatpush1.bf16.msra.mxu0 %v229
    %243 = vmatprep.subr.bf16.mxu0 0
    %244 = vmatpush1.bf16.msra.mxu0 %v228
    %245 = vmatprep.subr.bf16.mxu0 0
    %246 = vmatpush1.bf16.msra.mxu0 %v227
    %247 = vmatprep.subr.bf16.mxu0 0
    %248 = vmatpush1.bf16.msra.mxu0 %v226
    %249 = vmatprep.subr.bf16.mxu0 0
    %250 = vmatpush1.bf16.msra.mxu0 %v225
    %251 = vmatprep.subr.bf16.mxu0 0
    %252 = vmatpush1.bf16.msra.mxu0 %v224
    %253 = vmatprep.subr.bf16.mxu0 0
    %254 = vmatpush1.bf16.msra.mxu0 %v223
    %255 = vmatprep.subr.bf16.mxu0 0
    %256 = vmatpush2.bf16.msra.mxu0 0
    %257 = vmatprep.subr.bf16.mxu0 0
    %258 = vmatpush2.bf16.msra.mxu0 0
    %259 = vmatprep.subr.bf16.mxu0 0
    %260 = vmatpush2.bf16.msra.mxu0 0
    %261 = vmatprep.subr.bf16.mxu0 0
    %262 = vmatpush2.bf16.msra.mxu0 0
    %263 = vmatprep.subr.bf16.mxu0 0
    %264 = vmatpush2.bf16.msra.mxu0 0
    %265 = vmatprep.subr.bf16.mxu0 0
    %266 = vmatpush2.bf16.msra.mxu0 0
    %267 = vmatprep.subr.bf16.mxu0 0
    %268 = vmatpush2.bf16.msra.mxu0 0
    %269 = vmatprep.subr.bf16.mxu0 0
    %270 = vmatpush2.bf16.msra.mxu0 0
    %271 = vmatprep.mubr.bf16.mxu0 0
    %272 = vmatmul.mubr.bf16.gmra.mxu0 %v167
    %v273 = vpop.f32.mrf.mxu0
    %v274 = vadd.f32 %v189, %v273
    %v275 = vpop.f32.mrf.mxu0
    %v276 = vpop.f32.mrf.mxu0
    %v277 = vpop.f32.mrf.mxu0
    %278 = vdwg.mxu0
    %v279 = vlaneseq
    %v280 = vand.u32 %v279, 127
    %vm281 = vcmp.lt.s32.totalorder %v280, 3
    %v282 = vsel %vm281, %v274, -1e+30
    %283 = vst [vmem:[#allocation7] sm:$0x3] %v282
    %vm284 = vcmask 1041408
    %v285 = vsel %vm284, %v282, -inf
    %286 = vmax.xlane.f32.xlu0 %v285
    %v287 = vpop.xlane.xlu0 %286
    %v288 = vsub.f32 %v282, %v287
    %v289 = vmul.f32 %v288, 1.442695
    %v290 = vpow.pop %v289
    %v291 = vsel %vm284, %v290, 0.0
    %292 = vadd.xlane.f32.xlu0 %v291
    %v293 = vpop.xlane.xlu0 %292
    %v294 = vrcp.pop %v293
    %v295 = vmul.f32 %v290, %v294
    %296 = vst [vmem:[#allocation8] sm:$0x3] %v295
    // Predicated region
    $region30: #{nli_cls_forward.1} parent=1 // pred_check
      _
    $region31: #{nli_cls_forward.1} parent=1 // pred_check_branch
      %298 = sbr.rel (0) target = $region33
    $region32: #{nli_cls_forward.1} parent=1 // pred_region
      %s300 = ssub.s32 32, 32
      %301 = vsyncadd [#allocation4], %s300
      %s303 = sshll.u32 [#allocation7], 4
      %s304 = int_to_ptr.vmem [resolvable:$true] %s303
      %306 = dma.vmem_to_hbm [thread:$0]  %s304, 32, %s5, [#allocation4]
    $region33: #{nli_cls_forward.1} parent=1 // pred_fallthru
      _
    // Predicated region
    $region34: #{nli_cls_forward.1} parent=1 // pred_check
      _
    $region35: #{nli_cls_forward.1} parent=1 // pred_check_branch
      %308 = sbr.rel (0) target = $region37
    $region36: #{nli_cls_forward.1} parent=1 // pred_region
      %s310 = ssub.s32 32, 32
      %311 = vsyncadd [#allocation9], %s310
      %s313 = sshll.u32 [#allocation8], 4
      %s314 = int_to_ptr.vmem [resolvable:$true] %s313
      %316 = dma.vmem_to_hbm [thread:$0]  %s314, 32, %s6, [#allocation9]
    $region37: #{nli_cls_forward.1} parent=1 // pred_fallthru
      _
    // Predicated region
    $region38: #{nli_cls_forward.1} parent=1 // pred_check
      _
    $region39: #{nli_cls_forward.1} parent=1 // pred_check_branch
      %318 = sbr.rel (0) target = $region41
    $region40: #{nli_cls_forward.1} parent=1 // pred_region
      %319 = dma.done [#allocation4], 32
    $region41: #{nli_cls_forward.1} parent=1 // pred_fallthru
      _
    // Predicated region
    $region42: #{nli_cls_forward.1} parent=1 // pred_check
      _
    $region43: #{nli_cls_forward.1} parent=1 // pred_check_branch
      %321 = sbr.rel (0) target = $region45
    $region44: #{nli_cls_forward.1} parent=1 // pred_region
      %322 = dma.done [#allocation9], 32
    $region45: #{nli_cls_forward.1} parent=1 // pred_fallthru
      _
    %323 = vsyncpa [#allocation3], 1
    %324 = vsyncpa [#allocation6], 1
    %325 = vsyncpa [#allocation4], 1
    %326 = vsyncpa [#allocation9], 1

</llo_original>
